<compile_context>
chip_gen: v5e
topology: v5e:2x2
jax: 0.10.0
libtpu: 0.0.40
codegen_flags: <defaults>
</compile_context>

<pallas_src>
import functools

import jax
import jax.numpy as jnp
import numpy as np
from jax.experimental import pallas as pl
from jax.experimental.pallas import tpu as pltpu


def cbam_kernel(x_ref, w1_ref, w2_ref, wsa_ref, o_ref, *, true_l, k_taps):
    """One grid step processes a (Bg, C, Lp) batch-group slab.

    x_ref / o_ref : (Bg, C, Lp) VMEM, Lp multiple of 128; lanes >= true_l are 0.
    w1_ref : (C//r, C) VMEM  -- Conv1d(C -> C//r, k=1), no bias
    w2_ref : (C, C//r) VMEM  -- Conv1d(C//r -> C, k=1), no bias
    wsa_ref: (2, K)   SMEM   -- Conv1d(2 -> 1, k=K), no bias (scalar taps)
    """
    bg, c, lp = x_ref.shape
    pad = (k_taps - 1) // 2

    w1 = w1_ref[...]
    w2 = w2_ref[...]

    # Lane-validity mask (Lp >= true_l because of lane-dense padding).
    lane = jax.lax.broadcasted_iota(jnp.int32, (1, lp), 1)
    lane_valid = lane < true_l                                    # (1, Lp)

    # Banded (Lp, Lp) matrices for the "same" K-tap 1-D conv, built once per
    # grid step from SMEM scalar taps:  conv = avg_c @ m_avg + max_c @ m_max.
    # m[j, l] = wsa[ch, j - l + pad] when that tap index is in [0, K).
    row = jax.lax.broadcasted_iota(jnp.int32, (lp, lp), 0)        # source idx j
    col = jax.lax.broadcasted_iota(jnp.int32, (lp, lp), 1)        # output idx l
    band = row - col + pad                                        # tap index
    m_avg = jnp.zeros((lp, lp), jnp.float32)
    m_max = jnp.zeros((lp, lp), jnp.float32)
    for k in range(k_taps):                                       # static (K=7)
        hit = band == k
        m_avg = m_avg + jnp.where(hit, wsa_ref[0, k], 0.0)
        m_max = m_max + jnp.where(hit, wsa_ref[1, k], 0.0)

    for b in range(bg):                                           # static unroll
        x = x_ref[b]                                              # (C, Lp)

        # ---- Channel attention: shared MLP on the full map, pool afterwards ----
        h = jnp.maximum(
            jnp.dot(w1, x, preferred_element_type=jnp.float32), 0.0)    # (C/r, Lp)
        y = jnp.dot(w2, h, preferred_element_type=jnp.float32)          # (C, Lp)
        avg_out = jnp.sum(y, axis=-1, keepdims=True) * (1.0 / true_l)   # (C, 1)
        max_out = jnp.max(jnp.where(lane_valid, y, -jnp.inf),
                          axis=-1, keepdims=True)                       # (C, 1)
        ca = jax.nn.sigmoid(avg_out + max_out)                          # (C, 1)
        x1 = ca * x                                       # (C, Lp); padded lanes stay 0

        # ---- Spatial attention ----
        avg_c = jnp.mean(x1, axis=0, keepdims=True)                     # (1, Lp)
        max_c = jnp.max(x1, axis=0, keepdims=True)                      # (1, Lp)
        conv = (jnp.dot(avg_c, m_avg, preferred_element_type=jnp.float32)
                + jnp.dot(max_c, m_max, preferred_element_type=jnp.float32))
        sa = jax.nn.sigmoid(conv)                                       # (1, Lp)

        o_ref[b] = (sa * x1).astype(o_ref.dtype)


def cbam_forward(x, w1, w2, wsa):
    b, c, l = x.shape
    ch = w1.shape[0]
    k_taps = wsa.shape[1]

    # Lane-dense slab: pad L up to a multiple of 128 (full-width stores).
    lp = max(128, ((l + 127) // 128) * 128)
    x_in = jnp.pad(x, ((0, 0), (0, 0), (0, lp - l))) if lp != l else x

    # Batch grouping: keep a 2-wide "parallel" axis when possible (v7x has two
    # TensorCores); each grid step folds B/G batch elements.
    g = 2 if (b >= 2 and b % 2 == 0) else 1
    bg = b // g

    kernel = functools.partial(cbam_kernel, true_l=l, k_taps=k_taps)

    # TODO(synk): for very large L, tile L inside the kernel (two-pass pipeline)
    # instead of materializing the (Lp, Lp) band matrices.
    flops = b * (4 * ch * c * lp + 4 * lp * lp + 8 * c * lp)
    transcendentals = b * (c + lp)
    bytes_accessed = 4 * (2 * b * c * lp + 2 * ch * c + 2 * k_taps)

    out = pl.pallas_call(
        kernel,
        out_shape=jax.ShapeDtypeStruct((b, c, lp), x.dtype),
        grid_spec=pltpu.PrefetchScalarGridSpec(
            num_scalar_prefetch=0,
            grid=(g,),
            in_specs=[
                pl.BlockSpec((bg, c, lp), lambda i: (i, 0, 0)),
                pl.BlockSpec(w1.shape, lambda i: (0, 0)),
                pl.BlockSpec(w2.shape, lambda i: (0, 0)),
                pl.BlockSpec(memory_space=pltpu.MemorySpace.SMEM),
            ],
            out_specs=pl.BlockSpec((bg, c, lp), lambda i: (i, 0, 0)),
        ),
        compiler_params=pltpu.CompilerParams(
            dimension_semantics=("parallel",),
            vmem_limit_bytes=32 * 1024 * 1024,
        ),
        cost_estimate=pl.CostEstimate(
            flops=flops,
            transcendentals=transcendentals,
            bytes_accessed=bytes_accessed,
        ),
    )(x_in, w1, w2, wsa)

    return out[:, :, :l] if lp != l else out


def cbam_reference(x, w1, w2, wsa):
    # Pure-JAX reference of the PyTorch forward (MLP on full map, pool after).
    h = jnp.maximum(jnp.einsum("oc,bcl->bol", w1, x), 0.0)
    y = jnp.einsum("co,bol->bcl", w2, h)
    ca = jax.nn.sigmoid(y.mean(-1, keepdims=True) + y.max(-1, keepdims=True))
    x1 = ca * x
    st = jnp.stack([x1.mean(1), x1.max(1)], axis=1)          # (B, 2, L)
    pad = (wsa.shape[1] - 1) // 2
    conv = jax.lax.conv_general_dilated(
        st, wsa[None], window_strides=(1,), padding=[(pad, pad)],
        dimension_numbers=("NCH", "OIH", "NCH"))
    sa = jax.nn.sigmoid(conv)                                # (B, 1, L)
    return sa * x1


if __name__ == "__main__":
    B, C, L = 2, 16, 32          # planes = 16, ratio = 8 -> hidden = 2
    ratio = 8
    K = 7                        # SpatialAttention kernel_size = 7, padding = 3

    key = jax.random.PRNGKey(0)
    kx, kw1, kw2, kw3 = jax.random.split(key, 4)

    x = jax.random.normal(kx, (B, C, L), dtype=jnp.float32)
    w1 = jax.random.normal(kw1, (C // ratio, C), dtype=jnp.float32) * 0.2   # (C//8, C)
    w2 = jax.random.normal(kw2, (C, C // ratio), dtype=jnp.float32) * 0.2   # (C, C//8)
    wsa = jax.random.normal(kw3, (2, K), dtype=jnp.float32) * 0.2           # (2, 7)

    out = jax.block_until_ready(cbam_forward(x, w1, w2, wsa))
    ref = jax.block_until_ready(cbam_reference(x, w1, w2, wsa))

    np.testing.assert_allclose(np.asarray(out), np.asarray(ref),
                               rtol=2e-5, atol=2e-5)
    print("KERNEL_OK")
</pallas_src>

<mosaic_0001>
module attributes {stable_mosaic.version = 11 : i64} {
  func.func @cbam_kernel(%arg0: i32, %arg1: memref<1x16x128xf32, #tpu.memory_space<vmem>>, %arg2: memref<2x16xf32, #tpu.memory_space<vmem>>, %arg3: memref<16x2xf32, #tpu.memory_space<vmem>>, %arg4: memref<2x7xf32, #tpu.memory_space<smem>>, %arg5: memref<1x16x128xf32, #tpu.memory_space<vmem>>) attributes {dimension_semantics = [#tpu.dimension_semantics<parallel>], iteration_bounds = array<i64: 2>, scalar_prefetch = 0 : i64, scratch_operands = 0 : i64, tpu.core_type = #tpu.core_type<tc>, window_params = [{transform_indices = @transform_0, window_bounds = array<i64: 1, 16, 128>}, {pipeline_mode = #tpu.pipeline_mode<synchronous>, transform_indices = @transform_1, window_bounds = array<i64: 2, 16>}, {pipeline_mode = #tpu.pipeline_mode<synchronous>, transform_indices = @transform_2, window_bounds = array<i64: 16, 2>}, {transform_indices = @transform_3, window_bounds = array<i64: 2, 7>}, {transform_indices = @transform_4, window_bounds = array<i64: 1, 16, 128>}]} {
    %c0 = arith.constant 0 : index
    %c0_0 = arith.constant 0 : index
    %0 = vector.load %arg2[%c0, %c0_0] : memref<2x16xf32, #tpu.memory_space<vmem>>, vector<2x16xf32>
    %c0_1 = arith.constant 0 : index
    %c0_2 = arith.constant 0 : index
    %1 = vector.load %arg3[%c0_1, %c0_2] : memref<16x2xf32, #tpu.memory_space<vmem>>, vector<16x2xf32>
    %2 = tpu.iota {dimensions = array<i32: 1>} : vector<1x128xi32>
    %c32_i32 = arith.constant 32 : i32
    %3 = vector.broadcast %c32_i32 : i32 to vector<1x128xi32>
    %4 = arith.cmpi slt, %2, %3 : vector<1x128xi32>
    %5 = tpu.iota {dimensions = array<i32: 0>} : vector<128x128xi32>
    %6 = tpu.iota {dimensions = array<i32: 1>} : vector<128x128xi32>
    %7 = arith.subi %5, %6 : vector<128x128xi32>
    %c3_i32 = arith.constant 3 : i32
    %8 = vector.broadcast %c3_i32 : i32 to vector<128x128xi32>
    %9 = arith.addi %7, %8 : vector<128x128xi32>
    %cst = arith.constant 0.000000e+00 : f32
    %10 = vector.broadcast %cst : f32 to vector<128x128xf32>
    %cst_3 = arith.constant 0.000000e+00 : f32
    %11 = vector.broadcast %cst_3 : f32 to vector<128x128xf32>
    %c0_i32 = arith.constant 0 : i32
    %12 = vector.broadcast %c0_i32 : i32 to vector<128x128xi32>
    %13 = arith.cmpi eq, %9, %12 : vector<128x128xi32>
    %c0_4 = arith.constant 0 : index
    %c0_5 = arith.constant 0 : index
    %14 = memref.load %arg4[%c0_4, %c0_5] : memref<2x7xf32, #tpu.memory_space<smem>>
    %cst_6 = arith.constant 0.000000e+00 : f32
    %15 = vector.broadcast %14 : f32 to vector<128x128xf32>
    %16 = vector.broadcast %cst_6 : f32 to vector<128x128xf32>
    %17 = arith.select %13, %15, %16 : vector<128x128xi1>, vector<128x128xf32>
    %18 = arith.addf %10, %17 : vector<128x128xf32>
    %c1 = arith.constant 1 : index
    %c0_7 = arith.constant 0 : index
    %19 = memref.load %arg4[%c1, %c0_7] : memref<2x7xf32, #tpu.memory_space<smem>>
    %cst_8 = arith.constant 0.000000e+00 : f32
    %20 = vector.broadcast %19 : f32 to vector<128x128xf32>
    %21 = vector.broadcast %cst_8 : f32 to vector<128x128xf32>
    %22 = arith.select %13, %20, %21 : vector<128x128xi1>, vector<128x128xf32>
    %23 = arith.addf %11, %22 : vector<128x128xf32>
    %c1_i32 = arith.constant 1 : i32
    %24 = vector.broadcast %c1_i32 : i32 to vector<128x128xi32>
    %25 = arith.cmpi eq, %9, %24 : vector<128x128xi32>
    %c0_9 = arith.constant 0 : index
    %c1_10 = arith.constant 1 : index
    %26 = memref.load %arg4[%c0_9, %c1_10] : memref<2x7xf32, #tpu.memory_space<smem>>
    %cst_11 = arith.constant 0.000000e+00 : f32
    %27 = vector.broadcast %26 : f32 to vector<128x128xf32>
    %28 = vector.broadcast %cst_11 : f32 to vector<128x128xf32>
    %29 = arith.select %25, %27, %28 : vector<128x128xi1>, vector<128x128xf32>
    %30 = arith.addf %18, %29 : vector<128x128xf32>
    %c1_12 = arith.constant 1 : index
    %c1_13 = arith.constant 1 : index
    %31 = memref.load %arg4[%c1_12, %c1_13] : memref<2x7xf32, #tpu.memory_space<smem>>
    %cst_14 = arith.constant 0.000000e+00 : f32
    %32 = vector.broadcast %31 : f32 to vector<128x128xf32>
    %33 = vector.broadcast %cst_14 : f32 to vector<128x128xf32>
    %34 = arith.select %25, %32, %33 : vector<128x128xi1>, vector<128x128xf32>
    %35 = arith.addf %23, %34 : vector<128x128xf32>
    %c2_i32 = arith.constant 2 : i32
    %36 = vector.broadcast %c2_i32 : i32 to vector<128x128xi32>
    %37 = arith.cmpi eq, %9, %36 : vector<128x128xi32>
    %c0_15 = arith.constant 0 : index
    %c2 = arith.constant 2 : index
    %38 = memref.load %arg4[%c0_15, %c2] : memref<2x7xf32, #tpu.memory_space<smem>>
    %cst_16 = arith.constant 0.000000e+00 : f32
    %39 = vector.broadcast %38 : f32 to vector<128x128xf32>
    %40 = vector.broadcast %cst_16 : f32 to vector<128x128xf32>
    %41 = arith.select %37, %39, %40 : vector<128x128xi1>, vector<128x128xf32>
    %42 = arith.addf %30, %41 : vector<128x128xf32>
    %c1_17 = arith.constant 1 : index
    %c2_18 = arith.constant 2 : index
    %43 = memref.load %arg4[%c1_17, %c2_18] : memref<2x7xf32, #tpu.memory_space<smem>>
    %cst_19 = arith.constant 0.000000e+00 : f32
    %44 = vector.broadcast %43 : f32 to vector<128x128xf32>
    %45 = vector.broadcast %cst_19 : f32 to vector<128x128xf32>
    %46 = arith.select %37, %44, %45 : vector<128x128xi1>, vector<128x128xf32>
    %47 = arith.addf %35, %46 : vector<128x128xf32>
    %c3_i32_20 = arith.constant 3 : i32
    %48 = vector.broadcast %c3_i32_20 : i32 to vector<128x128xi32>
    %49 = arith.cmpi eq, %9, %48 : vector<128x128xi32>
    %c0_21 = arith.constant 0 : index
    %c3 = arith.constant 3 : index
    %50 = memref.load %arg4[%c0_21, %c3] : memref<2x7xf32, #tpu.memory_space<smem>>
    %cst_22 = arith.constant 0.000000e+00 : f32
    %51 = vector.broadcast %50 : f32 to vector<128x128xf32>
    %52 = vector.broadcast %cst_22 : f32 to vector<128x128xf32>
    %53 = arith.select %49, %51, %52 : vector<128x128xi1>, vector<128x128xf32>
    %54 = arith.addf %42, %53 : vector<128x128xf32>
    %c1_23 = arith.constant 1 : index
    %c3_24 = arith.constant 3 : index
    %55 = memref.load %arg4[%c1_23, %c3_24] : memref<2x7xf32, #tpu.memory_space<smem>>
    %cst_25 = arith.constant 0.000000e+00 : f32
    %56 = vector.broadcast %55 : f32 to vector<128x128xf32>
    %57 = vector.broadcast %cst_25 : f32 to vector<128x128xf32>
    %58 = arith.select %49, %56, %57 : vector<128x128xi1>, vector<128x128xf32>
    %59 = arith.addf %47, %58 : vector<128x128xf32>
    %c4_i32 = arith.constant 4 : i32
    %60 = vector.broadcast %c4_i32 : i32 to vector<128x128xi32>
    %61 = arith.cmpi eq, %9, %60 : vector<128x128xi32>
    %c0_26 = arith.constant 0 : index
    %c4 = arith.constant 4 : index
    %62 = memref.load %arg4[%c0_26, %c4] : memref<2x7xf32, #tpu.memory_space<smem>>
    %cst_27 = arith.constant 0.000000e+00 : f32
    %63 = vector.broadcast %62 : f32 to vector<128x128xf32>
    %64 = vector.broadcast %cst_27 : f32 to vector<128x128xf32>
    %65 = arith.select %61, %63, %64 : vector<128x128xi1>, vector<128x128xf32>
    %66 = arith.addf %54, %65 : vector<128x128xf32>
    %c1_28 = arith.constant 1 : index
    %c4_29 = arith.constant 4 : index
    %67 = memref.load %arg4[%c1_28, %c4_29] : memref<2x7xf32, #tpu.memory_space<smem>>
    %cst_30 = arith.constant 0.000000e+00 : f32
    %68 = vector.broadcast %67 : f32 to vector<128x128xf32>
    %69 = vector.broadcast %cst_30 : f32 to vector<128x128xf32>
    %70 = arith.select %61, %68, %69 : vector<128x128xi1>, vector<128x128xf32>
    %71 = arith.addf %59, %70 : vector<128x128xf32>
    %c5_i32 = arith.constant 5 : i32
    %72 = vector.broadcast %c5_i32 : i32 to vector<128x128xi32>
    %73 = arith.cmpi eq, %9, %72 : vector<128x128xi32>
    %c0_31 = arith.constant 0 : index
    %c5 = arith.constant 5 : index
    %74 = memref.load %arg4[%c0_31, %c5] : memref<2x7xf32, #tpu.memory_space<smem>>
    %cst_32 = arith.constant 0.000000e+00 : f32
    %75 = vector.broadcast %74 : f32 to vector<128x128xf32>
    %76 = vector.broadcast %cst_32 : f32 to vector<128x128xf32>
    %77 = arith.select %73, %75, %76 : vector<128x128xi1>, vector<128x128xf32>
    %78 = arith.addf %66, %77 : vector<128x128xf32>
    %c1_33 = arith.constant 1 : index
    %c5_34 = arith.constant 5 : index
    %79 = memref.load %arg4[%c1_33, %c5_34] : memref<2x7xf32, #tpu.memory_space<smem>>
    %cst_35 = arith.constant 0.000000e+00 : f32
    %80 = vector.broadcast %79 : f32 to vector<128x128xf32>
    %81 = vector.broadcast %cst_35 : f32 to vector<128x128xf32>
    %82 = arith.select %73, %80, %81 : vector<128x128xi1>, vector<128x128xf32>
    %83 = arith.addf %71, %82 : vector<128x128xf32>
    %c6_i32 = arith.constant 6 : i32
    %84 = vector.broadcast %c6_i32 : i32 to vector<128x128xi32>
    %85 = arith.cmpi eq, %9, %84 : vector<128x128xi32>
    %c0_36 = arith.constant 0 : index
    %c6 = arith.constant 6 : index
    %86 = memref.load %arg4[%c0_36, %c6] : memref<2x7xf32, #tpu.memory_space<smem>>
    %cst_37 = arith.constant 0.000000e+00 : f32
    %87 = vector.broadcast %86 : f32 to vector<128x128xf32>
    %88 = vector.broadcast %cst_37 : f32 to vector<128x128xf32>
    %89 = arith.select %85, %87, %88 : vector<128x128xi1>, vector<128x128xf32>
    %90 = arith.addf %78, %89 : vector<128x128xf32>
    %c1_38 = arith.constant 1 : index
    %c6_39 = arith.constant 6 : index
    %91 = memref.load %arg4[%c1_38, %c6_39] : memref<2x7xf32, #tpu.memory_space<smem>>
    %cst_40 = arith.constant 0.000000e+00 : f32
    %92 = vector.broadcast %91 : f32 to vector<128x128xf32>
    %93 = vector.broadcast %cst_40 : f32 to vector<128x128xf32>
    %94 = arith.select %85, %92, %93 : vector<128x128xi1>, vector<128x128xf32>
    %95 = arith.addf %83, %94 : vector<128x128xf32>
    %c0_41 = arith.constant 0 : index
    %c0_42 = arith.constant 0 : index
    %c0_43 = arith.constant 0 : index
    %96 = vector.load %arg1[%c0_41, %c0_42, %c0_43] : memref<1x16x128xf32, #tpu.memory_space<vmem>>, vector<1x16x128xf32>
    %97 = vector.shape_cast %96 : vector<1x16x128xf32> to vector<16x128xf32>
    %cst_44 = arith.constant dense<0.000000e+00> : vector<2x128xf32>
    %98 = tpu.matmul %0, %97, %cst_44 {dimension_numbers = #tpu.dot_dimension_numbers<[1], [0], [0], [1], [0, 0, 1, 1], [], []>} : vector<2x16xf32>, vector<16x128xf32>, vector<2x128xf32> -> vector<2x128xf32>
    %cst_45 = arith.constant 0.000000e+00 : f32
    %99 = vector.broadcast %cst_45 : f32 to vector<2x128xf32>
    %100 = arith.maximumf %98, %99 : vector<2x128xf32>
    %cst_46 = arith.constant dense<0.000000e+00> : vector<16x128xf32>
    %101 = tpu.matmul %1, %100, %cst_46 {dimension_numbers = #tpu.dot_dimension_numbers<[1], [0], [0], [1], [0, 0, 1, 1], [], []>} : vector<16x2xf32>, vector<2x128xf32>, vector<16x128xf32> -> vector<16x128xf32>
    %cst_47 = arith.constant dense<0.000000e+00> : vector<16xf32>
    %102 = vector.multi_reduction <add>, %101, %cst_47 [1] : vector<16x128xf32> to vector<16xf32>
    %103 = vector.shape_cast %102 : vector<16xf32> to vector<16x1xf32>
    %cst_48 = arith.constant 3.125000e-02 : f32
    %104 = vector.broadcast %cst_48 : f32 to vector<16x1xf32>
    %105 = arith.mulf %103, %104 : vector<16x1xf32>
    %cst_49 = arith.constant 0xFF800000 : f32
    %106 = vector.shape_cast %4 : vector<1x128xi1> to vector<1x128xi1>
    %107 = vector.broadcast %106 : vector<1x128xi1> to vector<16x128xi1>
    %108 = vector.broadcast %cst_49 : f32 to vector<16x128xf32>
    %109 = arith.select %107, %101, %108 : vector<16x128xi1>, vector<16x128xf32>
    %cst_50 = arith.constant dense<0xFF800000> : vector<16xf32>
    %110 = vector.multi_reduction <maximumf>, %109, %cst_50 [1] : vector<16x128xf32> to vector<16xf32>
    %111 = vector.shape_cast %110 : vector<16xf32> to vector<16x1xf32>
    %112 = arith.addf %105, %111 : vector<16x1xf32>
    %113 = arith.negf %112 : vector<16x1xf32>
    %114 = math.exp %113 : vector<16x1xf32>
    %cst_51 = arith.constant 1.000000e+00 : f32
    %115 = vector.broadcast %cst_51 : f32 to vector<16x1xf32>
    %116 = arith.addf %115, %114 : vector<16x1xf32>
    %117 = arith.divf %115, %116 : vector<16x1xf32>
    %118 = vector.broadcast %117 : vector<16x1xf32> to vector<16x128xf32>
    %119 = arith.mulf %118, %97 : vector<16x128xf32>
    %cst_52 = arith.constant dense<0.000000e+00> : vector<128xf32>
    %120 = vector.multi_reduction <add>, %119, %cst_52 [0] : vector<16x128xf32> to vector<128xf32>
    %121 = vector.shape_cast %120 : vector<128xf32> to vector<1x128xf32>
    %cst_53 = arith.constant 1.600000e+01 : f32
    %122 = vector.broadcast %cst_53 : f32 to vector<1x128xf32>
    %123 = arith.divf %121, %122 : vector<1x128xf32>
    %cst_54 = arith.constant dense<0xFF800000> : vector<128xf32>
    %124 = vector.multi_reduction <maximumf>, %119, %cst_54 [0] : vector<16x128xf32> to vector<128xf32>
    %125 = vector.shape_cast %124 : vector<128xf32> to vector<1x128xf32>
    %cst_55 = arith.constant dense<0.000000e+00> : vector<1x128xf32>
    %126 = tpu.matmul %123, %90, %cst_55 {dimension_numbers = #tpu.dot_dimension_numbers<[1], [0], [0], [1], [0, 0, 1, 1], [], []>} : vector<1x128xf32>, vector<128x128xf32>, vector<1x128xf32> -> vector<1x128xf32>
    %cst_56 = arith.constant dense<0.000000e+00> : vector<1x128xf32>
    %127 = tpu.matmul %125, %95, %cst_56 {dimension_numbers = #tpu.dot_dimension_numbers<[1], [0], [0], [1], [0, 0, 1, 1], [], []>} : vector<1x128xf32>, vector<128x128xf32>, vector<1x128xf32> -> vector<1x128xf32>
    %128 = arith.addf %126, %127 : vector<1x128xf32>
    %129 = arith.negf %128 : vector<1x128xf32>
    %130 = math.exp %129 : vector<1x128xf32>
    %cst_57 = arith.constant 1.000000e+00 : f32
    %131 = vector.broadcast %cst_57 : f32 to vector<1x128xf32>
    %132 = arith.addf %131, %130 : vector<1x128xf32>
    %133 = arith.divf %131, %132 : vector<1x128xf32>
    %134 = vector.broadcast %133 : vector<1x128xf32> to vector<16x128xf32>
    %135 = arith.mulf %134, %119 : vector<16x128xf32>
    %c0_58 = arith.constant 0 : index
    %c0_59 = arith.constant 0 : index
    %c0_60 = arith.constant 0 : index
    %136 = vector.load %arg5[%c0_58, %c0_59, %c0_60] : memref<1x16x128xf32, #tpu.memory_space<vmem>>, vector<1x16x128xf32>
    %137 = vector.shape_cast %136 : vector<1x16x128xf32> to vector<16x128xf32>
    %138 = vector.shape_cast %135 : vector<16x128xf32> to vector<1x16x128xf32>
    tpu.vector_store %arg5[%c0_58, %c0_59, %c0_60], %138 {strides = array<i32>} : memref<1x16x128xf32, #tpu.memory_space<vmem>>, vector<1x16x128xf32>,
    return
  }
  func.func @transform_0(%arg0: i32) -> (i32, i32, i32) {
    %c0_i32 = arith.constant 0 : i32
    %c0_i32_0 = arith.constant 0 : i32
    %c0_i32_1 = arith.constant 0 : i32
    return %arg0, %c0_i32, %c0_i32_0 : i32, i32, i32
  }
  func.func @transform_1(%arg0: i32) -> (i32, i32) {
    %c0_i32 = arith.constant 0 : i32
    %c0_i32_0 = arith.constant 0 : i32
    %c0_i32_1 = arith.constant 0 : i32
    return %c0_i32, %c0_i32_0 : i32, i32
  }
  func.func @transform_2(%arg0: i32) -> (i32, i32) {
    %c0_i32 = arith.constant 0 : i32
    %c0_i32_0 = arith.constant 0 : i32
    %c0_i32_1 = arith.constant 0 : i32
    return %c0_i32, %c0_i32_0 : i32, i32
  }
  func.func @transform_3(%arg0: i32) -> (i32, i32) {
    %c0_i32 = arith.constant 0 : i32
    %c0_i32_0 = arith.constant 0 : i32
    %c0_i32_1 = arith.constant 0 : i32
    return %c0_i32, %c0_i32_0 : i32, i32
  }
  func.func @transform_4(%arg0: i32) -> (i32, i32, i32) {
    %c0_i32 = arith.constant 0 : i32
    %c0_i32_0 = arith.constant 0 : i32
    %c0_i32_1 = arith.constant 0 : i32
    return %arg0, %c0_i32, %c0_i32_0 : i32, i32, i32
  }
}

</mosaic_0001>

<llo_original>
// kernel: tpu_custom_call.1
$region0: #{tpu_custom_call.1}
  #allocation0 [shape = 'u32[]', space=smem, size = 0x4, offset = 0x4, fixed_abs, tag = 'smem constant byte address 0x4 - core index']
  #allocation1 [shape = 'u32[72,128]{1,0:T(1,128)}', space=vmem, size = 0x9000, scoped, tag = 'internal scratch']
  %s0 = inlined_call_operand.hbm [shape: f32[2,16,128], index: 0, kind: input, shape index: {}]
  %s1 = inlined_call_operand.vmem [shape: f32[2,16], index: 1, kind: input, shape index: {}]
  %s2 = inlined_call_operand.vmem [shape: f32[16,2], index: 2, kind: input, shape index: {}]
  %s3 = inlined_call_operand.vmem [shape: f32[2,7], index: 3, kind: input, shape index: {}]
  %s4 = inlined_call_operand.hbm [shape: f32[2,16,128], index: 4, kind: output, shape index: {}]
  %s5 = sld [smem:[#allocation0]]
  $region57: #{tpu_custom_call.1} parent=0
    _
  %s7 = ssub.s32 1, %s5
  %s8 = scalar_select 0, %s7, %s5
  $region1: #{tpu_custom_call.1} parent=0
    #allocation2 [shape = 'u8[16384]{0}', space=vmem, size = 0x4000, scoped, tag = 'input window, operand 0']
    #allocation3 [shape = 's32[2]{0}', space=sflag, size = 0x8, scoped, tag = 'scoped memory for tpu_custom_call.1']
    #allocation4 [shape = 's32[2]{0}', space=sflag, size = 0x8, scoped, tag = 'scoped memory for tpu_custom_call.1']
    #allocation5 [shape = 's32[2]{0}', space=sflag, size = 0x8, scoped, tag = 'scoped memory for tpu_custom_call.1']
    #allocation6 [shape = 'u8[1024]{0}', space=smem, size = 0x400, scoped, tag = 'input window, operand 3, single buffered']
    #allocation7 [shape = 'u8[16384]{0}', space=vmem, size = 0x4000, scoped, tag = 'output window, operand 0']
    %9 = vsyncpa [#allocation3], 0
    %s10 = scalar_lea.sflag [#allocation3], 1
    %11 = vsyncpa %s10, 0
    %12 = vsyncpa [#allocation5], 0
    %13 = vsyncpa [#allocation4], 0
    %s14 = scalar_lea.sflag [#allocation4], 1
    %15 = vsyncpa %s14, 0
    loop: start=0, step=1, limit=4
    $region2: #{tpu_custom_call.1} parent=1 // loop_pre_header
      _
    $region3: #{tpu_custom_call.1} parent=1 // loop_header
      %s17 = sphi 0, %s21
      %p18 = scmp.ge.s32.totalorder %s17, 4
      %s27 = sphi 0, %s29
      %s30 = sphi 0, %s27
      %s31 = sphi 0, %s30
      %s47 = sphi 0, %s31
      %s51 = sphi 0, %s51
      %s53 = sphi 0, %s51
      %s54 = sphi 0, %s53
      %s68 = sphi 0, %s54
      %s72 = sphi 0, %s72
      %s74 = sphi 0, %s72
      %s75 = sphi 0, %s74
      %s89 = sphi 0, %s75
      %s93 = sphi 0, %s93
      %s95 = sphi 0, %s93
      %s96 = sphi 0, %s95
      %s110 = sphi 0, %s96
      %s116 = sphi 0, %s118
      %s119 = sphi 0, %s116
      %s120 = sphi 0, %s119
      %s136 = sphi 0, %s120
    $region4: #{tpu_custom_call.1} parent=1 // loop_header_branch
      %20 = sbr.rel (%p18) target = $region8
    $region5: #{tpu_custom_call.1} parent=1 // loop_body
      %s22 = ssub.s32 %s17, 1
      %s23 = ssub.s32 %s17, 2
      %s24 = sadd.s32 %s17, 1
      %s25 = ssub.s32 %s17, %s24
      %p26 = scmp.eq.s32.totalorder %s25, 0
      %s28 = sadd.s32 %s27, 1
      %s29 = scalar_select %p26, %s27, %s28
      %p32 = pneg %p26
      %p33 = scmp.eq.s32.totalorder %s17, 1
      %p34 = por %p32, %p33
      %p35 = scmp.ne.s32.totalorder %s27, %s30
      %p36 = scmp.eq.s32.totalorder %s17, 0
      %p37 = por %p35, %p36
      %p38 = scmp.ne.s32.totalorder %s27, %s30
      %p39 = scmp.eq.s32.totalorder %s22, 1
      %p40 = por %p38, %p39
      %p41 = scmp.ne.s32.totalorder %s30, %s31
      %p42 = scmp.eq.s32.totalorder %s22, 0
      %p43 = por %p41, %p42
      %p44 = scmp.ne.s32.totalorder %s30, %s31
      %p45 = scmp.eq.s32.totalorder %s23, 1
      %p46 = por %p44, %p45
      %p48 = scmp.ne.s32.totalorder %s31, %s47
      %p49 = scmp.eq.s32.totalorder %s23, 0
      %p50 = por %p48, %p49
      %s52 = sadd.s32 %s51, 1
      %p55 = scmp.eq.s32.totalorder %s17, 1
      %p56 = scmp.ne.s32.totalorder %s51, %s53
      %p57 = scmp.eq.s32.totalorder %s17, 0
      %p58 = por %p56, %p57
      %p59 = scmp.ne.s32.totalorder %s51, %s53
      %p60 = scmp.eq.s32.totalorder %s22, 1
      %p61 = por %p59, %p60
      %p62 = scmp.ne.s32.totalorder %s53, %s54
      %p63 = scmp.eq.s32.totalorder %s22, 0
      %p64 = por %p62, %p63
      %p65 = scmp.ne.s32.totalorder %s53, %s54
      %p66 = scmp.eq.s32.totalorder %s23, 1
      %p67 = por %p65, %p66
      %p69 = scmp.ne.s32.totalorder %s54, %s68
      %p70 = scmp.eq.s32.totalorder %s23, 0
      %p71 = por %p69, %p70
      %s73 = sadd.s32 %s72, 1
      %p76 = scmp.eq.s32.totalorder %s17, 1
      %p77 = scmp.ne.s32.totalorder %s72, %s74
      %p78 = scmp.eq.s32.totalorder %s17, 0
      %p79 = por %p77, %p78
      %p80 = scmp.ne.s32.totalorder %s72, %s74
      %p81 = scmp.eq.s32.totalorder %s22, 1
      %p82 = por %p80, %p81
      %p83 = scmp.ne.s32.totalorder %s74, %s75
      %p84 = scmp.eq.s32.totalorder %s22, 0
      %p85 = por %p83, %p84
      %p86 = scmp.ne.s32.totalorder %s74, %s75
      %p87 = scmp.eq.s32.totalorder %s23, 1
      %p88 = por %p86, %p87
      %p90 = scmp.ne.s32.totalorder %s75, %s89
      %p91 = scmp.eq.s32.totalorder %s23, 0
      %p92 = por %p90, %p91
      %s94 = sadd.s32 %s93, 1
      %p97 = scmp.eq.s32.totalorder %s17, 1
      %p98 = scmp.ne.s32.totalorder %s93, %s95
      %p99 = scmp.eq.s32.totalorder %s17, 0
      %p100 = por %p98, %p99
      %p101 = scmp.ne.s32.totalorder %s93, %s95
      %p102 = scmp.eq.s32.totalorder %s22, 1
      %p103 = por %p101, %p102
      %p104 = scmp.ne.s32.totalorder %s95, %s96
      %p105 = scmp.eq.s32.totalorder %s22, 0
      %p106 = por %p104, %p105
      %p107 = scmp.ne.s32.totalorder %s95, %s96
      %p108 = scmp.eq.s32.totalorder %s23, 1
      %p109 = por %p107, %p108
      %p111 = scmp.ne.s32.totalorder %s96, %s110
      %p112 = scmp.eq.s32.totalorder %s23, 0
      %p113 = por %p111, %p112
      %s114 = ssub.s32 %s17, %s24
      %p115 = scmp.eq.s32.totalorder %s114, 0
      %s117 = sadd.s32 %s116, 1
      %s118 = scalar_select %p115, %s116, %s117
      %p121 = pneg %p115
      %p122 = scmp.eq.s32.totalorder %s17, 1
      %p123 = por %p121, %p122
      %p124 = scmp.ne.s32.totalorder %s116, %s119
      %p125 = scmp.eq.s32.totalorder %s17, 0
      %p126 = por %p124, %p125
      %p127 = scmp.ne.s32.totalorder %s116, %s119
      %p128 = scmp.eq.s32.totalorder %s22, 1
      %p129 = por %p127, %p128
      %p130 = scmp.ne.s32.totalorder %s119, %s120
      %p131 = scmp.eq.s32.totalorder %s22, 0
      %p132 = por %p130, %p131
      %p133 = scmp.ne.s32.totalorder %s119, %s120
      %p134 = scmp.eq.s32.totalorder %s23, 1
      %p135 = por %p133, %p134
      %p137 = scmp.ne.s32.totalorder %s120, %s136
      %p138 = scmp.eq.s32.totalorder %s23, 0
      %p139 = por %p137, %p138
      %p140 = scmp.le.s32.totalorder 1, %s17
      %p141 = scmp.lt.s32.totalorder %s17, 3
      %p142 = pnand %p140, %p141
      %p143 = pneg %p142
      // Predicated region
      $region9: #{tpu_custom_call.1} parent=5 // pred_check
        _
      $region10: #{tpu_custom_call.1} parent=5 // pred_check_branch
        %145 = sbr.rel (%p142) target = $region12
      $region11: #{tpu_custom_call.1} parent=5 // pred_region
        %s146 = ssub.s32 %s17, 1
        // Predicated region
        $region13: #{tpu_custom_call.1} parent=11 // pred_check
          %p147 = pneg %p64
        $region14: #{tpu_custom_call.1} parent=11 // pred_check_branch
          %149 = sbr.rel (%p147) target = $region16
        $region15: #{tpu_custom_call.1} parent=11 // pred_region
          _
        $region16: #{tpu_custom_call.1} parent=11 // pred_fallthru
          _
        // Predicated region
        $region17: #{tpu_custom_call.1} parent=11 // pred_check
          %p150 = pneg %p85
        $region18: #{tpu_custom_call.1} parent=11 // pred_check_branch
          %152 = sbr.rel (%p150) target = $region20
        $region19: #{tpu_custom_call.1} parent=11 // pred_region
          _
        $region20: #{tpu_custom_call.1} parent=11 // pred_fallthru
          _
        // Predicated region
        $region21: #{tpu_custom_call.1} parent=11 // pred_check
          %p153 = pneg %p106
        $region22: #{tpu_custom_call.1} parent=11 // pred_check_branch
          %155 = sbr.rel (%p153) target = $region24
        $region23: #{tpu_custom_call.1} parent=11 // pred_region
          %157 = vsyncadd [#allocation5], 0
          %s159 = sshll.u32 %s3, 4
          %s160 = int_to_ptr.vmem [resolvable:$true] %s159
          %162 = dma.vmem_to_smem %s160, 32, [#allocation6], [#allocation5]
        $region24: #{tpu_custom_call.1} parent=11 // pred_fallthru
          _
      $region12: #{tpu_custom_call.1} parent=5 // pred_fallthru
        _
      %p163 = scmp.lt.s32.totalorder %s17, 2
      // Predicated region
      $region25: #{tpu_custom_call.1} parent=5 // pred_check
        %p164 = pneg %p163
      $region26: #{tpu_custom_call.1} parent=5 // pred_check_branch
        %166 = sbr.rel (%p164) target = $region28
      $region27: #{tpu_custom_call.1} parent=5 // pred_region
        // Predicated region
        $region29: #{tpu_custom_call.1} parent=27 // pred_check
          %p167 = pneg %p37
        $region30: #{tpu_custom_call.1} parent=27 // pred_check_branch
          %169 = sbr.rel (%p167) target = $region32
        $region31: #{tpu_custom_call.1} parent=27 // pred_region
          %s170 = sand.u32 %s27, 1
          %s171 = scalar_lea.sflag [#allocation3], %s170
          %s172 = sand.u32 %s27, 1
          %s173 = smul.addr %s172, 16
          %s174 = scalar_lea.vmem [#allocation2], %s173
          %176 = vsyncadd %s171, 0
          %s177 = smul.addr %s17, 2
          %s178 = smul.addr %s177, 8
          %s179 = scalar_lea.hbm %s0, %s178
          %s180 = sshll.u32 %s179, 4
          %s181 = int_to_ptr.hbm [resolvable:$true] %s180
          %s182 = sshll.u32 %s174, 4
          %s183 = int_to_ptr.vmem [resolvable:$true] %s182
          %188 = dma.hbm_to_vmem [thread:$0]  %s181, 256, %s183, %s171, 128, 128, 8
        $region32: #{tpu_custom_call.1} parent=27 // pred_fallthru
          _
      $region28: #{tpu_custom_call.1} parent=5 // pred_fallthru
        _
      %p189 = scmp.le.s32.totalorder 1, %s17
      %p190 = scmp.lt.s32.totalorder %s17, 3
      %p191 = pnand %p189, %p190
      %p192 = pneg %p191
      // Predicated region
      $region33: #{tpu_custom_call.1} parent=5 // pred_check
        _
      $region34: #{tpu_custom_call.1} parent=5 // pred_check_branch
        %194 = sbr.rel (%p191) target = $region36
      $region35: #{tpu_custom_call.1} parent=5 // pred_region
        %s195 = ssub.s32 %s17, 1
        %s196 = sand.u32 %s30, 1
        %s197 = scalar_lea.sflag [#allocation3], %s196
        %s198 = sand.u32 %s30, 1
        %s199 = smul.addr %s198, 16
        %s200 = scalar_lea.vmem [#allocation2], %s199
        // Predicated region
        $region37: #{tpu_custom_call.1} parent=35 // pred_check
          %p201 = pneg %p43
        $region38: #{tpu_custom_call.1} parent=35 // pred_check_branch
          %203 = sbr.rel (%p201) target = $region40
        $region39: #{tpu_custom_call.1} parent=35 // pred_region
          %205 = dma.done %s197, 256
        $region40: #{tpu_custom_call.1} parent=35 // pred_fallthru
          _
        // Predicated region
        $region41: #{tpu_custom_call.1} parent=35 // pred_check
          %p206 = pneg %p106
        $region42: #{tpu_custom_call.1} parent=35 // pred_check_branch
          %208 = sbr.rel (%p206) target = $region44
        $region43: #{tpu_custom_call.1} parent=35 // pred_region
          %210 = dma.done [#allocation5], 32
        $region44: #{tpu_custom_call.1} parent=35 // pred_fallthru
          _
        %211 = sfence
        %s212 = sand.u32 %s30, 1
        %s213 = scalar_lea.sflag [#allocation3], %s212
        %s214 = sand.u32 %s30, 1
        %s215 = smul.addr %s214, 16
        %s216 = scalar_lea.vmem [#allocation2], %s215
        %p217 = pneg %p43
        %p218 = pneg %p40
        %p219 = pneg %p64
        %p220 = pneg %p61
        %p221 = pneg %p85
        %p222 = pneg %p82
        %p223 = pneg %p106
        %p224 = pneg %p103
        %p225 = pneg %p132
        %p226 = pneg %p129
        %s227 = sand.u32 %s119, 1
        %s228 = scalar_lea.sflag [#allocation4], %s227
        %s229 = sand.u32 %s119, 1
        %s230 = smul.addr %s229, 16
        %s231 = scalar_lea.vmem [#allocation7], %s230
        %v232 = vld [vmem:[%s1] sm:$0x3]
        %v233 = vld [vmem:[%s2] sm:$0xff]
        %v234 = vld [vmem:[%s2 + $0x8] sm:$0xff]
        %v235 = vlaneseq
        %v236 = vand.u32 %v235, 127
        %vm237 = vcmp.lt.s32.totalorder %v236, 32
        %v238 = vlaneseq
        %v239 = vshrl.u32 %v238, 7
        %v240 = vadd.s32 %v239, 8
        %v241 = vadd.s32 %v239, 16
        %v242 = vadd.s32 %v239, 24
        %v243 = vadd.s32 %v239, 32
        %v244 = vadd.s32 %v239, 40
        %v245 = vadd.s32 %v239, 48
        %v246 = vadd.s32 %v239, 56
        %v247 = vadd.s32 %v239, 64
        %v248 = vadd.s32 %v239, 72
        %v249 = vadd.s32 %v239, 80
        %v250 = vadd.s32 %v239, 88
        %v251 = vadd.s32 %v239, 96
        %v252 = vadd.s32 %v239, 104
        %v253 = vadd.s32 %v239, 112
        %v254 = vadd.s32 %v239, 120
        %v255 = vsub.s32 %v239, %v236
        %v256 = vsub.s32 %v240, %v236
        %v257 = vsub.s32 %v241, %v236
        %v258 = vsub.s32 %v242, %v236
        %v259 = vsub.s32 %v243, %v236
        %v260 = vsub.s32 %v244, %v236
        %v261 = vsub.s32 %v245, %v236
        %v262 = vsub.s32 %v246, %v236
        %v263 = vsub.s32 %v247, %v236
        %v264 = vsub.s32 %v248, %v236
        %v265 = vsub.s32 %v249, %v236
        %v266 = vsub.s32 %v250, %v236
        %v267 = vsub.s32 %v251, %v236
        %v268 = vsub.s32 %v252, %v236
        %v269 = vsub.s32 %v253, %v236
        %v270 = vsub.s32 %v254, %v236
        %v271 = vadd.s32 %v255, 3
        %v272 = vadd.s32 %v256, 3
        %v273 = vadd.s32 %v257, 3
        %v274 = vadd.s32 %v258, 3
        %v275 = vadd.s32 %v259, 3
        %v276 = vadd.s32 %v260, 3
        %v277 = vadd.s32 %v261, 3
        %v278 = vadd.s32 %v262, 3
        %v279 = vadd.s32 %v263, 3
        %v280 = vadd.s32 %v264, 3
        %v281 = vadd.s32 %v265, 3
        %v282 = vadd.s32 %v266, 3
        %v283 = vadd.s32 %v267, 3
        %v284 = vadd.s32 %v268, 3
        %v285 = vadd.s32 %v269, 3
        %v286 = vadd.s32 %v270, 3
        %vm287 = vcmp.eq.s32.totalorder %v271, 0
        %vm288 = vcmp.eq.s32.totalorder %v272, 0
        %vm289 = vcmp.eq.s32.totalorder %v273, 0
        %vm290 = vcmp.eq.s32.totalorder %v274, 0
        %vm291 = vcmp.eq.s32.totalorder %v275, 0
        %vm292 = vcmp.eq.s32.totalorder %v276, 0
        %vm293 = vcmp.eq.s32.totalorder %v277, 0
        %vm294 = vcmp.eq.s32.totalorder %v278, 0
        %vm295 = vcmp.eq.s32.totalorder %v279, 0
        %vm296 = vcmp.eq.s32.totalorder %v280, 0
        %vm297 = vcmp.eq.s32.totalorder %v281, 0
        %vm298 = vcmp.eq.s32.totalorder %v282, 0
        %vm299 = vcmp.eq.s32.totalorder %v283, 0
        %vm300 = vcmp.eq.s32.totalorder %v284, 0
        %vm301 = vcmp.eq.s32.totalorder %v285, 0
        %vm302 = vcmp.eq.s32.totalorder %v286, 0
        %s303 = sld [smem:[#allocation6]]
        %v304 = vstv %s303
        %v305 = vsel %vm287, %v304, 0.0
        %v306 = vsel %vm288, %v304, 0.0
        %v307 = vsel %vm289, %v304, 0.0
        %v308 = vsel %vm290, %v304, 0.0
        %v309 = vsel %vm291, %v304, 0.0
        %v310 = vsel %vm292, %v304, 0.0
        %v311 = vsel %vm293, %v304, 0.0
        %v312 = vsel %vm294, %v304, 0.0
        %v313 = vsel %vm295, %v304, 0.0
        %v314 = vsel %vm296, %v304, 0.0
        %v315 = vsel %vm297, %v304, 0.0
        %v316 = vsel %vm298, %v304, 0.0
        %v317 = vsel %vm299, %v304, 0.0
        %v318 = vsel %vm300, %v304, 0.0
        %v319 = vsel %vm301, %v304, 0.0
        %v320 = vsel %vm302, %v304, 0.0
        %v321 = vadd.f32 %v305, 0.0
        %v322 = vadd.f32 %v306, 0.0
        %v323 = vadd.f32 %v307, 0.0
        %v324 = vadd.f32 %v308, 0.0
        %v325 = vadd.f32 %v309, 0.0
        %v326 = vadd.f32 %v310, 0.0
        %v327 = vadd.f32 %v311, 0.0
        %v328 = vadd.f32 %v312, 0.0
        %v329 = vadd.f32 %v313, 0.0
        %v330 = vadd.f32 %v314, 0.0
        %v331 = vadd.f32 %v315, 0.0
        %v332 = vadd.f32 %v316, 0.0
        %v333 = vadd.f32 %v317, 0.0
        %v334 = vadd.f32 %v318, 0.0
        %v335 = vadd.f32 %v319, 0.0
        %v336 = vadd.f32 %v320, 0.0
        %s337 = sld [smem:[#allocation6 + $0x80]]
        %v338 = vstv %s337
        %v339 = vsel %vm287, %v338, 0.0
        %v340 = vsel %vm288, %v338, 0.0
        %v341 = vsel %vm289, %v338, 0.0
        %v342 = vsel %vm290, %v338, 0.0
        %v343 = vsel %vm291, %v338, 0.0
        %v344 = vsel %vm292, %v338, 0.0
        %v345 = vsel %vm293, %v338, 0.0
        %v346 = vsel %vm294, %v338, 0.0
        %v347 = vsel %vm295, %v338, 0.0
        %v348 = vsel %vm296, %v338, 0.0
        %v349 = vsel %vm297, %v338, 0.0
        %v350 = vsel %vm298, %v338, 0.0
        %v351 = vsel %vm299, %v338, 0.0
        %v352 = vsel %vm300, %v338, 0.0
        %v353 = vsel %vm301, %v338, 0.0
        %v354 = vsel %vm302, %v338, 0.0
        %v355 = vadd.f32 %v339, 0.0
        %v356 = vadd.f32 %v340, 0.0
        %v357 = vadd.f32 %v341, 0.0
        %v358 = vadd.f32 %v342, 0.0
        %v359 = vadd.f32 %v343, 0.0
        %v360 = vadd.f32 %v344, 0.0
        %v361 = vadd.f32 %v345, 0.0
        %v362 = vadd.f32 %v346, 0.0
        %v363 = vadd.f32 %v347, 0.0
        %v364 = vadd.f32 %v348, 0.0
        %v365 = vadd.f32 %v349, 0.0
        %v366 = vadd.f32 %v350, 0.0
        %v367 = vadd.f32 %v351, 0.0
        %v368 = vadd.f32 %v352, 0.0
        %v369 = vadd.f32 %v353, 0.0
        %v370 = vadd.f32 %v354, 0.0
        %vm371 = vcmp.eq.s32.totalorder %v271, 1
        %vm372 = vcmp.eq.s32.totalorder %v272, 1
        %vm373 = vcmp.eq.s32.totalorder %v273, 1
        %vm374 = vcmp.eq.s32.totalorder %v274, 1
        %vm375 = vcmp.eq.s32.totalorder %v275, 1
        %vm376 = vcmp.eq.s32.totalorder %v276, 1
        %vm377 = vcmp.eq.s32.totalorder %v277, 1
        %vm378 = vcmp.eq.s32.totalorder %v278, 1
        %vm379 = vcmp.eq.s32.totalorder %v279, 1
        %vm380 = vcmp.eq.s32.totalorder %v280, 1
        %vm381 = vcmp.eq.s32.totalorder %v281, 1
        %vm382 = vcmp.eq.s32.totalorder %v282, 1
        %vm383 = vcmp.eq.s32.totalorder %v283, 1
        %vm384 = vcmp.eq.s32.totalorder %v284, 1
        %vm385 = vcmp.eq.s32.totalorder %v285, 1
        %vm386 = vcmp.eq.s32.totalorder %v286, 1
        %s387 = sld [smem:[#allocation6 + $0x1]]
        %v388 = vstv %s387
        %v389 = vsel %vm371, %v388, 0.0
        %v390 = vsel %vm372, %v388, 0.0
        %v391 = vsel %vm373, %v388, 0.0
        %v392 = vsel %vm374, %v388, 0.0
        %v393 = vsel %vm375, %v388, 0.0
        %v394 = vsel %vm376, %v388, 0.0
        %v395 = vsel %vm377, %v388, 0.0
        %v396 = vsel %vm378, %v388, 0.0
        %v397 = vsel %vm379, %v388, 0.0
        %v398 = vsel %vm380, %v388, 0.0
        %v399 = vsel %vm381, %v388, 0.0
        %v400 = vsel %vm382, %v388, 0.0
        %v401 = vsel %vm383, %v388, 0.0
        %v402 = vsel %vm384, %v388, 0.0
        %v403 = vsel %vm385, %v388, 0.0
        %v404 = vsel %vm386, %v388, 0.0
        %v405 = vadd.f32 %v321, %v389
        %v406 = vadd.f32 %v322, %v390
        %v407 = vadd.f32 %v323, %v391
        %v408 = vadd.f32 %v324, %v392
        %v409 = vadd.f32 %v325, %v393
        %v410 = vadd.f32 %v326, %v394
        %v411 = vadd.f32 %v327, %v395
        %v412 = vadd.f32 %v328, %v396
        %v413 = vadd.f32 %v329, %v397
        %v414 = vadd.f32 %v330, %v398
        %v415 = vadd.f32 %v331, %v399
        %v416 = vadd.f32 %v332, %v400
        %v417 = vadd.f32 %v333, %v401
        %v418 = vadd.f32 %v334, %v402
        %v419 = vadd.f32 %v335, %v403
        %v420 = vadd.f32 %v336, %v404
        %s421 = sld [smem:[#allocation6 + $0x81]]
        %v422 = vstv %s421
        %v423 = vsel %vm371, %v422, 0.0
        %v424 = vsel %vm372, %v422, 0.0
        %v425 = vsel %vm373, %v422, 0.0
        %v426 = vsel %vm374, %v422, 0.0
        %v427 = vsel %vm375, %v422, 0.0
        %v428 = vsel %vm376, %v422, 0.0
        %v429 = vsel %vm377, %v422, 0.0
        %v430 = vsel %vm378, %v422, 0.0
        %v431 = vsel %vm379, %v422, 0.0
        %v432 = vsel %vm380, %v422, 0.0
        %v433 = vsel %vm381, %v422, 0.0
        %v434 = vsel %vm382, %v422, 0.0
        %v435 = vsel %vm383, %v422, 0.0
        %v436 = vsel %vm384, %v422, 0.0
        %v437 = vsel %vm385, %v422, 0.0
        %v438 = vsel %vm386, %v422, 0.0
        %v439 = vadd.f32 %v355, %v423
        %v440 = vadd.f32 %v356, %v424
        %v441 = vadd.f32 %v357, %v425
        %v442 = vadd.f32 %v358, %v426
        %v443 = vadd.f32 %v359, %v427
        %v444 = vadd.f32 %v360, %v428
        %v445 = vadd.f32 %v361, %v429
        %v446 = vadd.f32 %v362, %v430
        %v447 = vadd.f32 %v363, %v431
        %v448 = vadd.f32 %v364, %v432
        %v449 = vadd.f32 %v365, %v433
        %v450 = vadd.f32 %v366, %v434
        %v451 = vadd.f32 %v367, %v435
        %v452 = vadd.f32 %v368, %v436
        %v453 = vadd.f32 %v369, %v437
        %v454 = vadd.f32 %v370, %v438
        %vm455 = vcmp.eq.s32.totalorder %v271, 2
        %vm456 = vcmp.eq.s32.totalorder %v272, 2
        %vm457 = vcmp.eq.s32.totalorder %v273, 2
        %vm458 = vcmp.eq.s32.totalorder %v274, 2
        %vm459 = vcmp.eq.s32.totalorder %v275, 2
        %vm460 = vcmp.eq.s32.totalorder %v276, 2
        %vm461 = vcmp.eq.s32.totalorder %v277, 2
        %vm462 = vcmp.eq.s32.totalorder %v278, 2
        %vm463 = vcmp.eq.s32.totalorder %v279, 2
        %vm464 = vcmp.eq.s32.totalorder %v280, 2
        %vm465 = vcmp.eq.s32.totalorder %v281, 2
        %vm466 = vcmp.eq.s32.totalorder %v282, 2
        %vm467 = vcmp.eq.s32.totalorder %v283, 2
        %vm468 = vcmp.eq.s32.totalorder %v284, 2
        %vm469 = vcmp.eq.s32.totalorder %v285, 2
        %vm470 = vcmp.eq.s32.totalorder %v286, 2
        %s471 = sld [smem:[#allocation6 + $0x2]]
        %v472 = vstv %s471
        %v473 = vsel %vm455, %v472, 0.0
        %v474 = vsel %vm456, %v472, 0.0
        %v475 = vsel %vm457, %v472, 0.0
        %v476 = vsel %vm458, %v472, 0.0
        %v477 = vsel %vm459, %v472, 0.0
        %v478 = vsel %vm460, %v472, 0.0
        %v479 = vsel %vm461, %v472, 0.0
        %v480 = vsel %vm462, %v472, 0.0
        %v481 = vsel %vm463, %v472, 0.0
        %v482 = vsel %vm464, %v472, 0.0
        %v483 = vsel %vm465, %v472, 0.0
        %v484 = vsel %vm466, %v472, 0.0
        %v485 = vsel %vm467, %v472, 0.0
        %v486 = vsel %vm468, %v472, 0.0
        %v487 = vsel %vm469, %v472, 0.0
        %v488 = vsel %vm470, %v472, 0.0
        %v489 = vadd.f32 %v405, %v473
        %v490 = vadd.f32 %v406, %v474
        %v491 = vadd.f32 %v407, %v475
        %v492 = vadd.f32 %v408, %v476
        %v493 = vadd.f32 %v409, %v477
        %v494 = vadd.f32 %v410, %v478
        %v495 = vadd.f32 %v411, %v479
        %v496 = vadd.f32 %v412, %v480
        %v497 = vadd.f32 %v413, %v481
        %v498 = vadd.f32 %v414, %v482
        %v499 = vadd.f32 %v415, %v483
        %v500 = vadd.f32 %v416, %v484
        %v501 = vadd.f32 %v417, %v485
        %v502 = vadd.f32 %v418, %v486
        %v503 = vadd.f32 %v419, %v487
        %v504 = vadd.f32 %v420, %v488
        %s505 = sld [smem:[#allocation6 + $0x82]]
        %v506 = vstv %s505
        %v507 = vsel %vm455, %v506, 0.0
        %v508 = vsel %vm456, %v506, 0.0
        %v509 = vsel %vm457, %v506, 0.0
        %v510 = vsel %vm458, %v506, 0.0
        %v511 = vsel %vm459, %v506, 0.0
        %v512 = vsel %vm460, %v506, 0.0
        %v513 = vsel %vm461, %v506, 0.0
        %v514 = vsel %vm462, %v506, 0.0
        %v515 = vsel %vm463, %v506, 0.0
        %v516 = vsel %vm464, %v506, 0.0
        %v517 = vsel %vm465, %v506, 0.0
        %v518 = vsel %vm466, %v506, 0.0
        %v519 = vsel %vm467, %v506, 0.0
        %v520 = vsel %vm468, %v506, 0.0
        %v521 = vsel %vm469, %v506, 0.0
        %v522 = vsel %vm470, %v506, 0.0
        %v523 = vadd.f32 %v439, %v507
        %v524 = vadd.f32 %v440, %v508
        %v525 = vadd.f32 %v441, %v509
        %v526 = vadd.f32 %v442, %v510
        %v527 = vadd.f32 %v443, %v511
        %v528 = vadd.f32 %v444, %v512
        %v529 = vadd.f32 %v445, %v513
        %v530 = vadd.f32 %v446, %v514
        %v531 = vadd.f32 %v447, %v515
        %v532 = vadd.f32 %v448, %v516
        %v533 = vadd.f32 %v449, %v517
        %v534 = vadd.f32 %v450, %v518
        %v535 = vadd.f32 %v451, %v519
        %v536 = vadd.f32 %v452, %v520
        %v537 = vadd.f32 %v453, %v521
        %v538 = vadd.f32 %v454, %v522
        %vm539 = vcmp.eq.s32.totalorder %v271, 3
        %vm540 = vcmp.eq.s32.totalorder %v272, 3
        %vm541 = vcmp.eq.s32.totalorder %v273, 3
        %vm542 = vcmp.eq.s32.totalorder %v274, 3
        %vm543 = vcmp.eq.s32.totalorder %v275, 3
        %vm544 = vcmp.eq.s32.totalorder %v276, 3
        %vm545 = vcmp.eq.s32.totalorder %v277, 3
        %vm546 = vcmp.eq.s32.totalorder %v278, 3
        %vm547 = vcmp.eq.s32.totalorder %v279, 3
        %vm548 = vcmp.eq.s32.totalorder %v280, 3
        %vm549 = vcmp.eq.s32.totalorder %v281, 3
        %vm550 = vcmp.eq.s32.totalorder %v282, 3
        %vm551 = vcmp.eq.s32.totalorder %v283, 3
        %vm552 = vcmp.eq.s32.totalorder %v284, 3
        %vm553 = vcmp.eq.s32.totalorder %v285, 3
        %vm554 = vcmp.eq.s32.totalorder %v286, 3
        %s555 = sld [smem:[#allocation6 + $0x3]]
        %v556 = vstv %s555
        %v557 = vsel %vm539, %v556, 0.0
        %v558 = vsel %vm540, %v556, 0.0
        %v559 = vsel %vm541, %v556, 0.0
        %v560 = vsel %vm542, %v556, 0.0
        %v561 = vsel %vm543, %v556, 0.0
        %v562 = vsel %vm544, %v556, 0.0
        %v563 = vsel %vm545, %v556, 0.0
        %v564 = vsel %vm546, %v556, 0.0
        %v565 = vsel %vm547, %v556, 0.0
        %v566 = vsel %vm548, %v556, 0.0
        %v567 = vsel %vm549, %v556, 0.0
        %v568 = vsel %vm550, %v556, 0.0
        %v569 = vsel %vm551, %v556, 0.0
        %v570 = vsel %vm552, %v556, 0.0
        %v571 = vsel %vm553, %v556, 0.0
        %v572 = vsel %vm554, %v556, 0.0
        %v573 = vadd.f32 %v489, %v557
        %v574 = vadd.f32 %v490, %v558
        %v575 = vadd.f32 %v491, %v559
        %v576 = vadd.f32 %v492, %v560
        %v577 = vadd.f32 %v493, %v561
        %v578 = vadd.f32 %v494, %v562
        %v579 = vadd.f32 %v495, %v563
        %v580 = vadd.f32 %v496, %v564
        %v581 = vadd.f32 %v497, %v565
        %v582 = vadd.f32 %v498, %v566
        %v583 = vadd.f32 %v499, %v567
        %v584 = vadd.f32 %v500, %v568
        %v585 = vadd.f32 %v501, %v569
        %v586 = vadd.f32 %v502, %v570
        %v587 = vadd.f32 %v503, %v571
        %v588 = vadd.f32 %v504, %v572
        %s589 = sld [smem:[#allocation6 + $0x83]]
        %v590 = vstv %s589
        %v591 = vsel %vm539, %v590, 0.0
        %v592 = vsel %vm540, %v590, 0.0
        %v593 = vsel %vm541, %v590, 0.0
        %v594 = vsel %vm542, %v590, 0.0
        %v595 = vsel %vm543, %v590, 0.0
        %v596 = vsel %vm544, %v590, 0.0
        %v597 = vsel %vm545, %v590, 0.0
        %v598 = vsel %vm546, %v590, 0.0
        %v599 = vsel %vm547, %v590, 0.0
        %v600 = vsel %vm548, %v590, 0.0
        %v601 = vsel %vm549, %v590, 0.0
        %v602 = vsel %vm550, %v590, 0.0
        %v603 = vsel %vm551, %v590, 0.0
        %v604 = vsel %vm552, %v590, 0.0
        %v605 = vsel %vm553, %v590, 0.0
        %v606 = vsel %vm554, %v590, 0.0
        %v607 = vadd.f32 %v523, %v591
        %v608 = vadd.f32 %v524, %v592
        %v609 = vadd.f32 %v525, %v593
        %v610 = vadd.f32 %v526, %v594
        %v611 = vadd.f32 %v527, %v595
        %v612 = vadd.f32 %v528, %v596
        %v613 = vadd.f32 %v529, %v597
        %v614 = vadd.f32 %v530, %v598
        %v615 = vadd.f32 %v531, %v599
        %v616 = vadd.f32 %v532, %v600
        %v617 = vadd.f32 %v533, %v601
        %v618 = vadd.f32 %v534, %v602
        %v619 = vadd.f32 %v535, %v603
        %v620 = vadd.f32 %v536, %v604
        %v621 = vadd.f32 %v537, %v605
        %v622 = vadd.f32 %v538, %v606
        %vm623 = vcmp.eq.s32.totalorder %v271, 4
        %vm624 = vcmp.eq.s32.totalorder %v272, 4
        %vm625 = vcmp.eq.s32.totalorder %v273, 4
        %vm626 = vcmp.eq.s32.totalorder %v274, 4
        %vm627 = vcmp.eq.s32.totalorder %v275, 4
        %vm628 = vcmp.eq.s32.totalorder %v276, 4
        %vm629 = vcmp.eq.s32.totalorder %v277, 4
        %vm630 = vcmp.eq.s32.totalorder %v278, 4
        %vm631 = vcmp.eq.s32.totalorder %v279, 4
        %vm632 = vcmp.eq.s32.totalorder %v280, 4
        %vm633 = vcmp.eq.s32.totalorder %v281, 4
        %vm634 = vcmp.eq.s32.totalorder %v282, 4
        %vm635 = vcmp.eq.s32.totalorder %v283, 4
        %vm636 = vcmp.eq.s32.totalorder %v284, 4
        %vm637 = vcmp.eq.s32.totalorder %v285, 4
        %vm638 = vcmp.eq.s32.totalorder %v286, 4
        %s639 = sld [smem:[#allocation6 + $0x4]]
        %v640 = vstv %s639
        %v641 = vsel %vm623, %v640, 0.0
        %v642 = vsel %vm624, %v640, 0.0
        %v643 = vsel %vm625, %v640, 0.0
        %v644 = vsel %vm626, %v640, 0.0
        %v645 = vsel %vm627, %v640, 0.0
        %v646 = vsel %vm628, %v640, 0.0
        %v647 = vsel %vm629, %v640, 0.0
        %v648 = vsel %vm630, %v640, 0.0
        %v649 = vsel %vm631, %v640, 0.0
        %v650 = vsel %vm632, %v640, 0.0
        %v651 = vsel %vm633, %v640, 0.0
        %v652 = vsel %vm634, %v640, 0.0
        %v653 = vsel %vm635, %v640, 0.0
        %v654 = vsel %vm636, %v640, 0.0
        %v655 = vsel %vm637, %v640, 0.0
        %v656 = vsel %vm638, %v640, 0.0
        %v657 = vadd.f32 %v573, %v641
        %v658 = vadd.f32 %v574, %v642
        %v659 = vadd.f32 %v575, %v643
        %v660 = vadd.f32 %v576, %v644
        %v661 = vadd.f32 %v577, %v645
        %v662 = vadd.f32 %v578, %v646
        %v663 = vadd.f32 %v579, %v647
        %v664 = vadd.f32 %v580, %v648
        %v665 = vadd.f32 %v581, %v649
        %v666 = vadd.f32 %v582, %v650
        %v667 = vadd.f32 %v583, %v651
        %v668 = vadd.f32 %v584, %v652
        %v669 = vadd.f32 %v585, %v653
        %v670 = vadd.f32 %v586, %v654
        %v671 = vadd.f32 %v587, %v655
        %v672 = vadd.f32 %v588, %v656
        %s673 = sld [smem:[#allocation6 + $0x84]]
        %v674 = vstv %s673
        %v675 = vsel %vm623, %v674, 0.0
        %v676 = vsel %vm624, %v674, 0.0
        %v677 = vsel %vm625, %v674, 0.0
        %v678 = vsel %vm626, %v674, 0.0
        %v679 = vsel %vm627, %v674, 0.0
        %v680 = vsel %vm628, %v674, 0.0
        %v681 = vsel %vm629, %v674, 0.0
        %v682 = vsel %vm630, %v674, 0.0
        %v683 = vsel %vm631, %v674, 0.0
        %v684 = vsel %vm632, %v674, 0.0
        %v685 = vsel %vm633, %v674, 0.0
        %v686 = vsel %vm634, %v674, 0.0
        %v687 = vsel %vm635, %v674, 0.0
        %v688 = vsel %vm636, %v674, 0.0
        %v689 = vsel %vm637, %v674, 0.0
        %v690 = vsel %vm638, %v674, 0.0
        %v691 = vadd.f32 %v607, %v675
        %v692 = vadd.f32 %v608, %v676
        %v693 = vadd.f32 %v609, %v677
        %v694 = vadd.f32 %v610, %v678
        %v695 = vadd.f32 %v611, %v679
        %v696 = vadd.f32 %v612, %v680
        %v697 = vadd.f32 %v613, %v681
        %v698 = vadd.f32 %v614, %v682
        %v699 = vadd.f32 %v615, %v683
        %v700 = vadd.f32 %v616, %v684
        %v701 = vadd.f32 %v617, %v685
        %v702 = vadd.f32 %v618, %v686
        %v703 = vadd.f32 %v619, %v687
        %v704 = vadd.f32 %v620, %v688
        %v705 = vadd.f32 %v621, %v689
        %v706 = vadd.f32 %v622, %v690
        %vm707 = vcmp.eq.s32.totalorder %v271, 5
        %vm708 = vcmp.eq.s32.totalorder %v272, 5
        %vm709 = vcmp.eq.s32.totalorder %v273, 5
        %vm710 = vcmp.eq.s32.totalorder %v274, 5
        %vm711 = vcmp.eq.s32.totalorder %v275, 5
        %vm712 = vcmp.eq.s32.totalorder %v276, 5
        %vm713 = vcmp.eq.s32.totalorder %v277, 5
        %vm714 = vcmp.eq.s32.totalorder %v278, 5
        %vm715 = vcmp.eq.s32.totalorder %v279, 5
        %vm716 = vcmp.eq.s32.totalorder %v280, 5
        %vm717 = vcmp.eq.s32.totalorder %v281, 5
        %vm718 = vcmp.eq.s32.totalorder %v282, 5
        %vm719 = vcmp.eq.s32.totalorder %v283, 5
        %vm720 = vcmp.eq.s32.totalorder %v284, 5
        %vm721 = vcmp.eq.s32.totalorder %v285, 5
        %vm722 = vcmp.eq.s32.totalorder %v286, 5
        %s723 = sld [smem:[#allocation6 + $0x5]]
        %v724 = vstv %s723
        %v725 = vsel %vm707, %v724, 0.0
        %v726 = vsel %vm708, %v724, 0.0
        %v727 = vsel %vm709, %v724, 0.0
        %v728 = vsel %vm710, %v724, 0.0
        %v729 = vsel %vm711, %v724, 0.0
        %v730 = vsel %vm712, %v724, 0.0
        %v731 = vsel %vm713, %v724, 0.0
        %v732 = vsel %vm714, %v724, 0.0
        %v733 = vsel %vm715, %v724, 0.0
        %v734 = vsel %vm716, %v724, 0.0
        %v735 = vsel %vm717, %v724, 0.0
        %v736 = vsel %vm718, %v724, 0.0
        %v737 = vsel %vm719, %v724, 0.0
        %v738 = vsel %vm720, %v724, 0.0
        %v739 = vsel %vm721, %v724, 0.0
        %v740 = vsel %vm722, %v724, 0.0
        %v741 = vadd.f32 %v657, %v725
        %v742 = vadd.f32 %v658, %v726
        %v743 = vadd.f32 %v659, %v727
        %v744 = vadd.f32 %v660, %v728
        %v745 = vadd.f32 %v661, %v729
        %v746 = vadd.f32 %v662, %v730
        %v747 = vadd.f32 %v663, %v731
        %v748 = vadd.f32 %v664, %v732
        %v749 = vadd.f32 %v665, %v733
        %v750 = vadd.f32 %v666, %v734
        %v751 = vadd.f32 %v667, %v735
        %v752 = vadd.f32 %v668, %v736
        %v753 = vadd.f32 %v669, %v737
        %v754 = vadd.f32 %v670, %v738
        %v755 = vadd.f32 %v671, %v739
        %v756 = vadd.f32 %v672, %v740
        %s757 = sld [smem:[#allocation6 + $0x85]]
        %v758 = vstv %s757
        %v759 = vsel %vm707, %v758, 0.0
        %v760 = vsel %vm708, %v758, 0.0
        %v761 = vsel %vm709, %v758, 0.0
        %v762 = vsel %vm710, %v758, 0.0
        %v763 = vsel %vm711, %v758, 0.0
        %v764 = vsel %vm712, %v758, 0.0
        %v765 = vsel %vm713, %v758, 0.0
        %v766 = vsel %vm714, %v758, 0.0
        %v767 = vsel %vm715, %v758, 0.0
        %v768 = vsel %vm716, %v758, 0.0
        %v769 = vsel %vm717, %v758, 0.0
        %v770 = vsel %vm718, %v758, 0.0
        %v771 = vsel %vm719, %v758, 0.0
        %v772 = vsel %vm720, %v758, 0.0
        %v773 = vsel %vm721, %v758, 0.0
        %v774 = vsel %vm722, %v758, 0.0
        %v775 = vadd.f32 %v691, %v759
        %v776 = vadd.f32 %v692, %v760
        %v777 = vadd.f32 %v693, %v761
        %v778 = vadd.f32 %v694, %v762
        %v779 = vadd.f32 %v695, %v763
        %v780 = vadd.f32 %v696, %v764
        %v781 = vadd.f32 %v697, %v765
        %v782 = vadd.f32 %v698, %v766
        %v783 = vadd.f32 %v699, %v767
        %v784 = vadd.f32 %v700, %v768
        %v785 = vadd.f32 %v701, %v769
        %v786 = vadd.f32 %v702, %v770
        %v787 = vadd.f32 %v703, %v771
        %v788 = vadd.f32 %v704, %v772
        %v789 = vadd.f32 %v705, %v773
        %v790 = vadd.f32 %v706, %v774
        %vm791 = vcmp.eq.s32.totalorder %v271, 6
        %vm792 = vcmp.eq.s32.totalorder %v272, 6
        %vm793 = vcmp.eq.s32.totalorder %v273, 6
        %vm794 = vcmp.eq.s32.totalorder %v274, 6
        %vm795 = vcmp.eq.s32.totalorder %v275, 6
        %vm796 = vcmp.eq.s32.totalorder %v276, 6
        %vm797 = vcmp.eq.s32.totalorder %v277, 6
        %vm798 = vcmp.eq.s32.totalorder %v278, 6
        %vm799 = vcmp.eq.s32.totalorder %v279, 6
        %vm800 = vcmp.eq.s32.totalorder %v280, 6
        %vm801 = vcmp.eq.s32.totalorder %v281, 6
        %vm802 = vcmp.eq.s32.totalorder %v282, 6
        %vm803 = vcmp.eq.s32.totalorder %v283, 6
        %vm804 = vcmp.eq.s32.totalorder %v284, 6
        %vm805 = vcmp.eq.s32.totalorder %v285, 6
        %vm806 = vcmp.eq.s32.totalorder %v286, 6
        %s807 = sld [smem:[#allocation6 + $0x6]]
        %v808 = vstv %s807
        %v809 = vsel %vm791, %v808, 0.0
        %v810 = vsel %vm792, %v808, 0.0
        %v811 = vsel %vm793, %v808, 0.0
        %v812 = vsel %vm794, %v808, 0.0
        %v813 = vsel %vm795, %v808, 0.0
        %v814 = vsel %vm796, %v808, 0.0
        %v815 = vsel %vm797, %v808, 0.0
        %v816 = vsel %vm798, %v808, 0.0
        %v817 = vsel %vm799, %v808, 0.0
        %v818 = vsel %vm800, %v808, 0.0
        %v819 = vsel %vm801, %v808, 0.0
        %v820 = vsel %vm802, %v808, 0.0
        %v821 = vsel %vm803, %v808, 0.0
        %v822 = vsel %vm804, %v808, 0.0
        %v823 = vsel %vm805, %v808, 0.0
        %v824 = vsel %vm806, %v808, 0.0
        %v825 = vadd.f32 %v741, %v809
        %v826 = vadd.f32 %v742, %v810
        %v827 = vadd.f32 %v743, %v811
        %v828 = vadd.f32 %v744, %v812
        %v829 = vadd.f32 %v745, %v813
        %v830 = vadd.f32 %v746, %v814
        %v831 = vadd.f32 %v747, %v815
        %v832 = vadd.f32 %v748, %v816
        %v833 = vadd.f32 %v749, %v817
        %v834 = vadd.f32 %v750, %v818
        %v835 = vadd.f32 %v751, %v819
        %v836 = vadd.f32 %v752, %v820
        %v837 = vadd.f32 %v753, %v821
        %v838 = vadd.f32 %v754, %v822
        %v839 = vadd.f32 %v755, %v823
        %v840 = vadd.f32 %v756, %v824
        %s841 = sld [smem:[#allocation6 + $0x86]]
        %v842 = vstv %s841
        %v843 = vsel %vm791, %v842, 0.0
        %v844 = vsel %vm792, %v842, 0.0
        %v845 = vsel %vm793, %v842, 0.0
        %v846 = vsel %vm794, %v842, 0.0
        %v847 = vsel %vm795, %v842, 0.0
        %v848 = vsel %vm796, %v842, 0.0
        %v849 = vsel %vm797, %v842, 0.0
        %v850 = vsel %vm798, %v842, 0.0
        %v851 = vsel %vm799, %v842, 0.0
        %v852 = vsel %vm800, %v842, 0.0
        %v853 = vsel %vm801, %v842, 0.0
        %v854 = vsel %vm802, %v842, 0.0
        %v855 = vsel %vm803, %v842, 0.0
        %v856 = vsel %vm804, %v842, 0.0
        %v857 = vsel %vm805, %v842, 0.0
        %v858 = vsel %vm806, %v842, 0.0
        %v859 = vadd.f32 %v775, %v843
        %v860 = vadd.f32 %v776, %v844
        %v861 = vadd.f32 %v777, %v845
        %v862 = vadd.f32 %v778, %v846
        %v863 = vadd.f32 %v779, %v847
        %v864 = vadd.f32 %v780, %v848
        %v865 = vadd.f32 %v781, %v849
        %v866 = vadd.f32 %v782, %v850
        %v867 = vadd.f32 %v783, %v851
        %v868 = vadd.f32 %v784, %v852
        %v869 = vadd.f32 %v785, %v853
        %v870 = vadd.f32 %v786, %v854
        %v871 = vadd.f32 %v787, %v855
        %v872 = vadd.f32 %v788, %v856
        %v873 = vadd.f32 %v789, %v857
        %v874 = vadd.f32 %v790, %v858
        %v875 = vld [vmem:[%s200] sm:$0xff]
        %v876 = vld [vmem:[%s200 + $0x8] sm:$0xff]
        %vm877 = vcmask 130048
        %v879 = vsel %vm877, %v232, 0
        %881 = vmatpush.msra.mxu0 0.0
        %882 = vmatpush.msra.mxu0 0.0
        %883 = vmatpush.msra.mxu0 0.0
        %884 = vmatpush.msra.mxu0 0.0
        %885 = vmatpush.msra.mxu0 0.0
        %886 = vmatpush.msra.mxu0 0.0
        %887 = vmatpush.msra.mxu0 0.0
        %888 = vmatpush.msra.mxu0 0.0
        %889 = vmatpush.msra.mxu0 0.0
        %890 = vmatpush.msra.mxu0 0.0
        %891 = vmatpush.msra.mxu0 0.0
        %892 = vmatpush.msra.mxu0 0.0
        %893 = vmatpush.msra.mxu0 0.0
        %894 = vmatpush.msra.mxu0 0.0
        %895 = vmatpush.msra.mxu0 %v876
        %896 = vmatpush.msra.mxu0 %v875
        %897 = vmatmul.f32.gmra.mxu0 %v879
        %v898 = vpop.f32.mrf.mxu0
        %v899 = vadd.f32 0.0, %v898
        %900 = vdwg.mxu0
        %v901 = vmax.f32 %v899, 0.0
        %vm902 = vcmask 15360
        %v904 = vsel %vm902, %v233, 0
        %v907 = vsel %vm902, %v234, 0
        %vm909 = vcmask 1041408
        %v911 = vsel %vm909, %v901, 0
        %913 = vmatpush.msra.mxu0 0.0
        %914 = vmatpush.msra.mxu0 0.0
        %915 = vmatpush.msra.mxu0 0.0
        %916 = vmatpush.msra.mxu0 0.0
        %917 = vmatpush.msra.mxu0 0.0
        %918 = vmatpush.msra.mxu0 0.0
        %919 = vmatpush.msra.mxu0 0.0
        %920 = vmatpush.msra.mxu0 0.0
        %921 = vmatpush.msra.mxu0 0.0
        %922 = vmatpush.msra.mxu0 0.0
        %923 = vmatpush.msra.mxu0 0.0
        %924 = vmatpush.msra.mxu0 0.0
        %925 = vmatpush.msra.mxu0 0.0
        %926 = vmatpush.msra.mxu0 0.0
        %927 = vmatpush.msra.mxu0 0.0
        %928 = vmatpush.msra.mxu0 %v911
        %929 = vmatmul.f32.gmra.mxu0 %v904
        %v930 = vpop.f32.mrf.mxu0
        %v931 = vadd.f32 0.0, %v930
        %932 = vmatmul.f32.gmra.mxu0 %v907
        %v933 = vpop.f32.mrf.mxu0
        %v934 = vadd.f32 0.0, %v933
        %935 = vdwg.mxu0
        %936 = vadd.xlane.f32.xlu0 %v931
        %v937 = vpop.xlane.xlu0 %936
        %938 = vadd.xlane.f32.xlu0 %v934
        %v939 = vpop.xlane.xlu0 %938
        %v940 = vmul.f32 %v937, 0.03125
        %v941 = vmul.f32 %v939, 0.03125
        %v942 = vsel %vm237, 1, 0
        %vm943 = vcmp.eq.s32.totalorder %v942, 1
        %v944 = vsel %vm943, %v931, -inf
        %v945 = vsel %vm943, %v934, -inf
        %946 = vmax.xlane.f32.xlu0 %v944
        %v947 = vpop.xlane.xlu0 %946
        %948 = vmax.xlane.f32.xlu0 %v945
        %v949 = vpop.xlane.xlu0 %948
        %v950 = vadd.f32 %v940, %v947
        %v951 = vadd.f32 %v941, %v949
        %v952 = vxor.u32 %v950, 2147483648
        %v953 = vxor.u32 %v951, 2147483648
        %v954 = vmul.f32 %v952, 1.442695
        %v955 = vpow.pop %v954
        %v956 = vmul.f32 %v953, 1.442695
        %v957 = vpow.pop %v956
        %v958 = vadd.f32 %v955, 1.0
        %v959 = vadd.f32 %v957, 1.0
        %v960 = vrcp.pop %v958
        %v961 = vmul.f32 %v958, %v960
        %v962 = vsub.f32 1.0, %v961
        %v963 = vmul.f32 %v960, %v962
        %v964 = vadd.f32 %v960, %v963
        %vm965 = vweird.f32 %v958
        %vm966 = vweird.f32 %v960
        %vm967 = vmor %vm965, %vm966
        %v968 = vsel %vm967, %v960, %v964
        %v969 = vand.u32 2147483647, %v958
        %vm970 = vcmp.eq.f32.partialorder %v969, 8.507059e+37
        %v971 = vand.u32 %v958, 2147483648
        %v972 = vor.u32 1.1754944e-38, %v971
        %v973 = vsel %vm970, %v972, %v968
        %v974 = vmul.f32 1.0, %v973
        %v975 = vrcp.pop %v959
        %v976 = vmul.f32 %v959, %v975
        %v977 = vsub.f32 1.0, %v976
        %v978 = vmul.f32 %v975, %v977
        %v979 = vadd.f32 %v975, %v978
        %vm980 = vweird.f32 %v959
        %vm981 = vweird.f32 %v975
        %vm982 = vmor %vm980, %vm981
        %v983 = vsel %vm982, %v975, %v979
        %v984 = vand.u32 2147483647, %v959
        %vm985 = vcmp.eq.f32.partialorder %v984, 8.507059e+37
        %v986 = vand.u32 %v959, 2147483648
        %v987 = vor.u32 1.1754944e-38, %v986
        %v988 = vsel %vm985, %v987, %v983
        %v989 = vmul.f32 1.0, %v988
        %v990 = vmul.f32 %v974, %v875
        %v991 = vmul.f32 %v989, %v876
        %v992 = vadd.f32 %v990, %v991
        %v993 = vrot.slane %v992, 4
        %v994 = vadd.f32 %v992, %v993
        %v995 = vrot.slane %v994, 2
        %v996 = vadd.f32 %v994, %v995
        %v997 = vrot.slane %v996, 1
        %v998 = vadd.f32 %v996, %v997
        %v999 = vrcp.pop 16.0
        %v1000 = vmul.f32 16.0, %v999
        %v1001 = vsub.f32 1.0, %v1000
        %v1002 = vmul.f32 %v999, %v1001
        %v1003 = vadd.f32 %v999, %v1002
        %vm1004 = vweird.f32 %v999
        %v1005 = vsel %vm1004, %v999, %v1003
        %v1006 = vmul.f32 %v998, %v1005
        %v1007 = vmax.f32 %v990, %v991
        %v1008 = vrot.slane %v1007, 4
        %v1009 = vmax.f32 %v1007, %v1008
        %v1010 = vrot.slane %v1009, 2
        %v1011 = vmax.f32 %v1009, %v1010
        %v1012 = vrot.slane %v1011, 1
        %v1013 = vmax.f32 %v1011, %v1012
        %1014 = vmatpush.msra.mxu0 %v874
        %1015 = vmatpush.msra.mxu0 %v873
        %1016 = vmatpush.msra.mxu0 %v872
        %1017 = vmatpush.msra.mxu0 %v871
        %1018 = vmatpush.msra.mxu0 %v870
        %1019 = vmatpush.msra.mxu0 %v869
        %1020 = vmatpush.msra.mxu0 %v868
        %1021 = vmatpush.msra.mxu0 %v867
        %1022 = vmatpush.msra.mxu0 %v866
        %1023 = vmatpush.msra.mxu0 %v865
        %1024 = vmatpush.msra.mxu0 %v864
        %1025 = vmatpush.msra.mxu0 %v863
        %1026 = vmatpush.msra.mxu0 %v862
        %1027 = vmatpush.msra.mxu0 %v861
        %1028 = vmatpush.msra.mxu0 %v860
        %1029 = vmatpush.msra.mxu0 %v859
        %1030 = vmatmul.f32.gmra.mxu0 %v1013
        %v1031 = vpop.f32.mrf.mxu0
        %v1032 = vadd.f32 0.0, %v1031
        %1033 = vdwg.mxu0
        %1034 = vmatpush.msra.mxu0 %v840
        %1035 = vmatpush.msra.mxu0 %v839
        %1036 = vmatpush.msra.mxu0 %v838
        %1037 = vmatpush.msra.mxu0 %v837
        %1038 = vmatpush.msra.mxu0 %v836
        %1039 = vmatpush.msra.mxu0 %v835
        %1040 = vmatpush.msra.mxu0 %v834
        %1041 = vmatpush.msra.mxu0 %v833
        %1042 = vmatpush.msra.mxu0 %v832
        %1043 = vmatpush.msra.mxu0 %v831
        %1044 = vmatpush.msra.mxu0 %v830
        %1045 = vmatpush.msra.mxu0 %v829
        %1046 = vmatpush.msra.mxu0 %v828
        %1047 = vmatpush.msra.mxu0 %v827
        %1048 = vmatpush.msra.mxu0 %v826
        %1049 = vmatpush.msra.mxu0 %v825
        %1050 = vmatmul.f32.gmra.mxu0 %v1006
        %v1051 = vpop.f32.mrf.mxu0
        %v1052 = vadd.f32 %v1032, %v1051
        %1053 = vdwg.mxu0
        %v1054 = vxor.u32 %v1052, 2147483648
        %v1055 = vmul.f32 %v1054, 1.442695
        %v1056 = vpow.pop %v1055
        %v1057 = vadd.f32 %v1056, 1.0
        %v1058 = vrcp.pop %v1057
        %v1059 = vmul.f32 %v1057, %v1058
        %v1060 = vsub.f32 1.0, %v1059
        %v1061 = vmul.f32 %v1058, %v1060
        %v1062 = vadd.f32 %v1058, %v1061
        %vm1063 = vweird.f32 %v1057
        %vm1064 = vweird.f32 %v1058
        %vm1065 = vmor %vm1063, %vm1064
        %v1066 = vsel %vm1065, %v1058, %v1062
        %v1067 = vand.u32 2147483647, %v1057
        %vm1068 = vcmp.eq.f32.partialorder %v1067, 8.507059e+37
        %v1069 = vand.u32 %v1057, 2147483648
        %v1070 = vor.u32 1.1754944e-38, %v1069
        %v1071 = vsel %vm1068, %v1070, %v1066
        %v1072 = vmul.f32 1.0, %v1071
        %v1073 = vperm.slane %v1072, 0
        %v1074 = vmul.f32 %v1073, %v990
        %v1075 = vmul.f32 %v1073, %v991
        %1076 = vst [vmem:[%s231] sm:$0xff] %v1074
        %1077 = vst [vmem:[%s231 + $0x8] sm:$0xff] %v1075
        %s1078 = sand.u32 %s119, 1
        %s1079 = scalar_lea.sflag [#allocation4], %s1078
        %s1080 = sand.u32 %s119, 1
        %s1081 = smul.addr %s1080, 16
        %s1082 = scalar_lea.vmem [#allocation7], %s1081
        // Predicated region
        $region45: #{tpu_custom_call.1} parent=35 // pred_check
          %p1083 = pneg %p129
        $region46: #{tpu_custom_call.1} parent=35 // pred_check_branch
          %1085 = sbr.rel (%p1083) target = $region48
        $region47: #{tpu_custom_call.1} parent=35 // pred_region
          %1087 = vsyncadd %s1079, 0
          %s1088 = smul.addr %s22, 2
          %s1089 = smul.addr %s1088, 8
          %s1090 = scalar_lea.hbm %s4, %s1089
          %s1091 = sshll.u32 %s1082, 4
          %s1092 = int_to_ptr.vmem [resolvable:$true] %s1091
          %s1093 = sshll.u32 %s1090, 4
          %s1094 = int_to_ptr.hbm [resolvable:$true] %s1093
          %1099 = dma.vmem_to_hbm [thread:$0]  %s1092, 256, %s1094, %s1079, 128, 128, 8
        $region48: #{tpu_custom_call.1} parent=35 // pred_fallthru
          _
      $region36: #{tpu_custom_call.1} parent=5 // pred_fallthru
        _
      %p1100 = scmp.le.s32.totalorder 2, %s17
      // Predicated region
      $region49: #{tpu_custom_call.1} parent=5 // pred_check
        %p1101 = pneg %p1100
      $region50: #{tpu_custom_call.1} parent=5 // pred_check_branch
        %1103 = sbr.rel (%p1101) target = $region52
      $region51: #{tpu_custom_call.1} parent=5 // pred_region
        %s1104 = ssub.s32 %s17, 2
        // Predicated region
        $region53: #{tpu_custom_call.1} parent=51 // pred_check
          %p1105 = pneg %p135
        $region54: #{tpu_custom_call.1} parent=51 // pred_check_branch
          %1107 = sbr.rel (%p1105) target = $region56
        $region55: #{tpu_custom_call.1} parent=51 // pred_region
          %s1108 = sand.u32 %s120, 1
          %s1109 = scalar_lea.sflag [#allocation4], %s1108
          %s1110 = sand.u32 %s120, 1
          %s1111 = smul.addr %s1110, 16
          %s1112 = scalar_lea.vmem [#allocation7], %s1111
          %1114 = dma.done %s1109, 256
        $region56: #{tpu_custom_call.1} parent=51 // pred_fallthru
          _
      $region52: #{tpu_custom_call.1} parent=5 // pred_fallthru
        _
    $region6: #{tpu_custom_call.1} parent=1 // loop_footer
      %s21 = sadd.s32 1, %s17
    $region7: #{tpu_custom_call.1} parent=1 // loop_footer_branch
      %16 = sbr.rel target = $region3
    $region8: #{tpu_custom_call.1} parent=1 // loop_exit
      _
    %1115 = vsyncpa [#allocation3], 1
    %s1116 = scalar_lea.sflag [#allocation3], 1
    %1117 = vsyncpa %s1116, 1
    %1118 = vsyncpa [#allocation4], 1
    %s1119 = scalar_lea.sflag [#allocation4], 1
    %1120 = vsyncpa %s1119, 1
    %1121 = vsyncpa [#allocation5], 1
    %s1122 = scalar_lea.sflag [#allocation5], 1
    %1123 = vsyncpa %s1122, 1

</llo_original>
